<compile_context>
chip_gen: v7x
topology: tpu7x:2x2x1
jax: 0.10.0
libtpu: 0.0.40
codegen_flags: <defaults>
</compile_context>

<pallas_src>
import functools

import jax
import jax.numpy as jnp
from jax.experimental import pallas as pl
from jax.experimental.pallas import tpu as pltpu

_NEG_SLOPE = 0.03  # nn.LeakyReLU(negative_slope=0.03)


def parse_params(params_str):
    """Mirror of Model.__init__: 'L-in-out' -> Linear(bias=True), 'D-p' -> Dropout,
    and a LeakyReLU is appended after *every* token (exactly as the reference code
    does, including after the last layer)."""
    toks = [t.strip().split("-") for t in params_str.split(",")]
    ops = []
    for tok in toks:
        if tok[0] == "L":
            ops.append(("linear", int(tok[1]), int(tok[2])))
        elif tok[0] == "D":
            # Dropout is identity at inference time (Model calls self.train(False)).
            ops.append(("dropout", float(tok[1])))
        ops.append(("lrelu",))
    return ops


def _leaky_relu(h):
    return jnp.where(h >= 0, h, jnp.float32(_NEG_SLOPE) * h)


def _mlp_kernel(*refs, ops):
    """refs = (x_ref, w0, b0, w1, b1, ..., out_ref); the layer stack is statically
    unrolled at trace time."""
    x_ref, out_ref = refs[0], refs[-1]
    wb = refs[1:-1]

    # Load the batch tile once; keep activations in f32 on-chip throughout.
    h = x_ref[...].astype(jnp.float32)

    li = 0
    for op in ops:
        if op[0] == "linear":
            w = wb[2 * li][...].astype(jnp.float32)
            b = wb[2 * li + 1][...].astype(jnp.float32)
            h = jnp.dot(h, w, preferred_element_type=jnp.float32) + b
            li += 1
        elif op[0] == "lrelu":
            h = _leaky_relu(h)
        # 'dropout': identity in eval mode.  TODO(synk): training-mode dropout
        # (pltpu.prng_random_bits masking) not implemented — forward is eval-only.

    out_ref[...] = h.astype(out_ref.dtype)


def mlp_forward(x, weights, biases, ops, *, batch_tile=512):
    """Forward pass of Model.

    x:        (B, d_in)
    weights:  list of (d_in_i, d_out_i) arrays (already transposed from the
              PyTorch (out, in) Linear layout).
    biases:   list of (d_out_i,) arrays.
    ops:      output of parse_params().
    """
    B, d_in = x.shape
    d_out = weights[-1].shape[1]

    # Batch tile: as large as reasonable (amortize grid-step overhead), but the
    # second-to-last block dim must be a multiple of 8 (or the full extent).
    tile_b = min(batch_tile, max(8, -(-B // 8) * 8))
    b_pad = -(-B // tile_b) * tile_b
    if b_pad != B:
        # Only the (tiny) batch remainder is padded; padded rows are sliced off.
        x = jnp.pad(x, ((0, b_pad - B), (0, 0)))
    grid = (b_pad // tile_b,)

    in_specs = [pl.BlockSpec((tile_b, d_in), lambda i: (i, 0))]
    flat_params = []
    for w, b in zip(weights, biases):
        di, do = w.shape
        in_specs.append(pl.BlockSpec((di, do), lambda i: (0, 0)))   # resident weight
        in_specs.append(pl.BlockSpec((1, do), lambda i: (0, 0)))    # resident bias
        flat_params.append(w)
        flat_params.append(b.reshape(1, do))

    out = pl.pallas_call(
        functools.partial(_mlp_kernel, ops=ops),
        out_shape=jax.ShapeDtypeStruct((b_pad, d_out), x.dtype),
        grid=grid,
        in_specs=in_specs,
        out_specs=pl.BlockSpec((tile_b, d_out), lambda i: (i, 0)),
        compiler_params=pltpu.CompilerParams(
            dimension_semantics=("parallel",),  # megacore sharding on v7x
        ),
    )(x, *flat_params)

    return out[:B]


def _ref_forward(x, weights, biases, ops):
    """Pure-JAX reference matching the PyTorch Model.forward semantics."""
    h = x.astype(jnp.float32)
    li = 0
    for op in ops:
        if op[0] == "linear":
            h = h @ weights[li].astype(jnp.float32) + biases[li].astype(jnp.float32)
            li += 1
        elif op[0] == "lrelu":
            h = jnp.where(h >= 0, h, _NEG_SLOPE * h)
    return h.astype(x.dtype)


if __name__ == "__main__":
    # Model("L-32-64, D-0.1, L-64-32, L-32-1") acting on a (batch=8, features=32) input.
    params_str = "L-32-64, D-0.1, L-64-32, L-32-1"
    ops = parse_params(params_str)

    key = jax.random.PRNGKey(0)
    kx, *kws = jax.random.split(key, 1 + 2 * sum(1 for o in ops if o[0] == "linear"))

    x = jax.random.normal(kx, (8, 32), dtype=jnp.float32)

    weights, biases = [], []
    ki = 0
    for op in ops:
        if op[0] == "linear":
            _, di, do = op
            scale = 1.0 / jnp.sqrt(jnp.float32(di))
            weights.append(scale * jax.random.normal(kws[ki], (di, do), dtype=jnp.float32))
            biases.append(scale * jax.random.normal(kws[ki + 1], (do,), dtype=jnp.float32))
            ki += 2

    y = jax.block_until_ready(mlp_forward(x, weights, biases, ops))

    y_ref = _ref_forward(x, weights, biases, ops)
    assert y.shape == y_ref.shape, (y.shape, y_ref.shape)
    assert jnp.allclose(y, y_ref, rtol=1e-4, atol=1e-4), (y, y_ref)

    print("KERNEL_OK")
</pallas_src>

<mosaic_0001>
module attributes {stable_mosaic.version = 11 : i64} {
  func.func @_mlp_kernel(%arg0: i32, %arg1: memref<8x32xf32, #tpu.memory_space<vmem>>, %arg2: memref<32x64xf32, #tpu.memory_space<vmem>>, %arg3: memref<1x64xf32, #tpu.memory_space<vmem>>, %arg4: memref<64x32xf32, #tpu.memory_space<vmem>>, %arg5: memref<1x32xf32, #tpu.memory_space<vmem>>, %arg6: memref<32x1xf32, #tpu.memory_space<vmem>>, %arg7: memref<1x1xf32, #tpu.memory_space<vmem>>, %arg8: memref<8x1xf32, #tpu.memory_space<vmem>>) attributes {dimension_semantics = [#tpu.dimension_semantics<parallel>], iteration_bounds = array<i64: 1>, scalar_prefetch = 0 : i64, scratch_operands = 0 : i64, tpu.core_type = #tpu.core_type<tc>, window_params = [{transform_indices = @transform_0, window_bounds = array<i64: 8, 32>}, {pipeline_mode = #tpu.pipeline_mode<synchronous>, transform_indices = @transform_1, window_bounds = array<i64: 32, 64>}, {pipeline_mode = #tpu.pipeline_mode<synchronous>, transform_indices = @transform_2, window_bounds = array<i64: 1, 64>}, {pipeline_mode = #tpu.pipeline_mode<synchronous>, transform_indices = @transform_3, window_bounds = array<i64: 64, 32>}, {pipeline_mode = #tpu.pipeline_mode<synchronous>, transform_indices = @transform_4, window_bounds = array<i64: 1, 32>}, {pipeline_mode = #tpu.pipeline_mode<synchronous>, transform_indices = @transform_5, window_bounds = array<i64: 32, 1>}, {pipeline_mode = #tpu.pipeline_mode<synchronous>, transform_indices = @transform_6, window_bounds = array<i64: 1, 1>}, {transform_indices = @transform_7, window_bounds = array<i64: 8, 1>}]} {
    %c0 = arith.constant 0 : index
    %c0_0 = arith.constant 0 : index
    %0 = vector.load %arg1[%c0, %c0_0] : memref<8x32xf32, #tpu.memory_space<vmem>>, vector<8x32xf32>
    %c0_1 = arith.constant 0 : index
    %c0_2 = arith.constant 0 : index
    %1 = vector.load %arg2[%c0_1, %c0_2] : memref<32x64xf32, #tpu.memory_space<vmem>>, vector<32x64xf32>
    %c0_3 = arith.constant 0 : index
    %c0_4 = arith.constant 0 : index
    %2 = vector.load %arg3[%c0_3, %c0_4] : memref<1x64xf32, #tpu.memory_space<vmem>>, vector<1x64xf32>
    %cst = arith.constant dense<0.000000e+00> : vector<8x64xf32>
    %3 = tpu.matmul %0, %1, %cst {dimension_numbers = #tpu.dot_dimension_numbers<[1], [0], [0], [1], [0, 0, 1, 1], [], []>} : vector<8x32xf32>, vector<32x64xf32>, vector<8x64xf32> -> vector<8x64xf32>
    %4 = vector.broadcast %2 : vector<1x64xf32> to vector<8x64xf32>
    %5 = arith.addf %3, %4 : vector<8x64xf32>
    %cst_5 = arith.constant 0.000000e+00 : f32
    %6 = vector.broadcast %cst_5 : f32 to vector<8x64xf32>
    %7 = arith.cmpf oge, %5, %6 : vector<8x64xf32>
    %cst_6 = arith.constant 3.000000e-02 : f32
    %8 = vector.broadcast %cst_6 : f32 to vector<8x64xf32>
    %9 = arith.mulf %8, %5 : vector<8x64xf32>
    %10 = arith.select %7, %5, %9 : vector<8x64xi1>, vector<8x64xf32>
    %cst_7 = arith.constant 0.000000e+00 : f32
    %11 = vector.broadcast %cst_7 : f32 to vector<8x64xf32>
    %12 = arith.cmpf oge, %10, %11 : vector<8x64xf32>
    %cst_8 = arith.constant 3.000000e-02 : f32
    %13 = vector.broadcast %cst_8 : f32 to vector<8x64xf32>
    %14 = arith.mulf %13, %10 : vector<8x64xf32>
    %15 = arith.select %12, %10, %14 : vector<8x64xi1>, vector<8x64xf32>
    %c0_9 = arith.constant 0 : index
    %c0_10 = arith.constant 0 : index
    %16 = vector.load %arg4[%c0_9, %c0_10] : memref<64x32xf32, #tpu.memory_space<vmem>>, vector<64x32xf32>
    %c0_11 = arith.constant 0 : index
    %c0_12 = arith.constant 0 : index
    %17 = vector.load %arg5[%c0_11, %c0_12] : memref<1x32xf32, #tpu.memory_space<vmem>>, vector<1x32xf32>
    %cst_13 = arith.constant dense<0.000000e+00> : vector<8x32xf32>
    %18 = tpu.matmul %15, %16, %cst_13 {dimension_numbers = #tpu.dot_dimension_numbers<[1], [0], [0], [1], [0, 0, 1, 1], [], []>} : vector<8x64xf32>, vector<64x32xf32>, vector<8x32xf32> -> vector<8x32xf32>
    %19 = vector.broadcast %17 : vector<1x32xf32> to vector<8x32xf32>
    %20 = arith.addf %18, %19 : vector<8x32xf32>
    %cst_14 = arith.constant 0.000000e+00 : f32
    %21 = vector.broadcast %cst_14 : f32 to vector<8x32xf32>
    %22 = arith.cmpf oge, %20, %21 : vector<8x32xf32>
    %cst_15 = arith.constant 3.000000e-02 : f32
    %23 = vector.broadcast %cst_15 : f32 to vector<8x32xf32>
    %24 = arith.mulf %23, %20 : vector<8x32xf32>
    %25 = arith.select %22, %20, %24 : vector<8x32xi1>, vector<8x32xf32>
    %c0_16 = arith.constant 0 : index
    %c0_17 = arith.constant 0 : index
    %26 = vector.load %arg6[%c0_16, %c0_17] : memref<32x1xf32, #tpu.memory_space<vmem>>, vector<32x1xf32>
    %c0_18 = arith.constant 0 : index
    %c0_19 = arith.constant 0 : index
    %27 = vector.load %arg7[%c0_18, %c0_19] : memref<1x1xf32, #tpu.memory_space<vmem>>, vector<1x1xf32>
    %cst_20 = arith.constant dense<0.000000e+00> : vector<8x1xf32>
    %28 = tpu.matmul %25, %26, %cst_20 {dimension_numbers = #tpu.dot_dimension_numbers<[1], [0], [0], [1], [0, 0, 1, 1], [], []>} : vector<8x32xf32>, vector<32x1xf32>, vector<8x1xf32> -> vector<8x1xf32>
    %29 = vector.broadcast %27 : vector<1x1xf32> to vector<8x1xf32>
    %30 = arith.addf %28, %29 : vector<8x1xf32>
    %cst_21 = arith.constant 0.000000e+00 : f32
    %31 = vector.broadcast %cst_21 : f32 to vector<8x1xf32>
    %32 = arith.cmpf oge, %30, %31 : vector<8x1xf32>
    %cst_22 = arith.constant 3.000000e-02 : f32
    %33 = vector.broadcast %cst_22 : f32 to vector<8x1xf32>
    %34 = arith.mulf %33, %30 : vector<8x1xf32>
    %35 = arith.select %32, %30, %34 : vector<8x1xi1>, vector<8x1xf32>
    %c0_23 = arith.constant 0 : index
    %c0_24 = arith.constant 0 : index
    %36 = vector.load %arg8[%c0_23, %c0_24] : memref<8x1xf32, #tpu.memory_space<vmem>>, vector<8x1xf32>
    tpu.vector_store %arg8[%c0_23, %c0_24], %35 {strides = array<i32>} : memref<8x1xf32, #tpu.memory_space<vmem>>, vector<8x1xf32>,
    return
  }
  func.func @transform_0(%arg0: i32) -> (i32, i32) {
    %c0_i32 = arith.constant 0 : i32
    %c0_i32_0 = arith.constant 0 : i32
    return %arg0, %c0_i32 : i32, i32
  }
  func.func @transform_1(%arg0: i32) -> (i32, i32) {
    %c0_i32 = arith.constant 0 : i32
    %c0_i32_0 = arith.constant 0 : i32
    %c0_i32_1 = arith.constant 0 : i32
    return %c0_i32, %c0_i32_0 : i32, i32
  }
  func.func @transform_2(%arg0: i32) -> (i32, i32) {
    %c0_i32 = arith.constant 0 : i32
    %c0_i32_0 = arith.constant 0 : i32
    %c0_i32_1 = arith.constant 0 : i32
    return %c0_i32, %c0_i32_0 : i32, i32
  }
  func.func @transform_3(%arg0: i32) -> (i32, i32) {
    %c0_i32 = arith.constant 0 : i32
    %c0_i32_0 = arith.constant 0 : i32
    %c0_i32_1 = arith.constant 0 : i32
    return %c0_i32, %c0_i32_0 : i32, i32
  }
  func.func @transform_4(%arg0: i32) -> (i32, i32) {
    %c0_i32 = arith.constant 0 : i32
    %c0_i32_0 = arith.constant 0 : i32
    %c0_i32_1 = arith.constant 0 : i32
    return %c0_i32, %c0_i32_0 : i32, i32
  }
  func.func @transform_5(%arg0: i32) -> (i32, i32) {
    %c0_i32 = arith.constant 0 : i32
    %c0_i32_0 = arith.constant 0 : i32
    %c0_i32_1 = arith.constant 0 : i32
    return %c0_i32, %c0_i32_0 : i32, i32
  }
  func.func @transform_6(%arg0: i32) -> (i32, i32) {
    %c0_i32 = arith.constant 0 : i32
    %c0_i32_0 = arith.constant 0 : i32
    %c0_i32_1 = arith.constant 0 : i32
    return %c0_i32, %c0_i32_0 : i32, i32
  }
  func.func @transform_7(%arg0: i32) -> (i32, i32) {
    %c0_i32 = arith.constant 0 : i32
    %c0_i32_0 = arith.constant 0 : i32
    return %arg0, %c0_i32 : i32, i32
  }
}

</mosaic_0001>

<llo_original>
// kernel: tpu_custom_call.1
$region0: #{tpu_custom_call.1}
  #allocation0 [shape = 'u32[]', space=smem, size = 0x4, offset = 0x4, fixed_abs, tag = 'smem constant byte address 0x4 - core index']
  #allocation1 [shape = 'u32[144,128]{1,0:T(1,128)}', space=vmem, size = 0x12000, scoped, tag = 'internal scratch']
  #allocation2 [shape = 'f32[1,1]{1,0:T(1,128)S(1)}', space=vmem, size = 0x200, scoped, tag = 'scoped memory for tpu_custom_call.1']
  %s0 = inlined_call_operand.vmem [shape: f32[8,32], index: 0, kind: input, shape index: {}]
  %s1 = inlined_call_operand.vmem [shape: f32[32,64], index: 1, kind: input, shape index: {}]
  %s2 = inlined_call_operand.vmem [shape: f32[1,64], index: 2, kind: input, shape index: {}]
  %s3 = inlined_call_operand.vmem [shape: f32[64,32], index: 3, kind: input, shape index: {}]
  %s4 = inlined_call_operand.vmem [shape: f32[1,32], index: 4, kind: input, shape index: {}]
  %s5 = inlined_call_operand.vmem [shape: f32[32,1], index: 5, kind: input, shape index: {}]
  %s6 = inlined_call_operand.<no memory space> [shape: f32[1,1], index: 6, kind: input, shape index: {}]
  %s7 = inlined_call_operand.vmem [shape: f32[8,1], index: 7, kind: output, shape index: {}]
  %s8 = sld [smem:[#allocation0]]
  $region38: #{tpu_custom_call.1} parent=0
    _
  %s10 = ssub.s32 1, %s8
  %s11 = scalar_select 0, %s10, %s8
  %v12 = vstv %s6
  %13 = vst [vmem:[#allocation2] sm:$0x1] %v12
  // Predicated region
  $region2: #{tpu_custom_call.1} parent=0 // pred_check
    _
  $region3: #{tpu_custom_call.1} parent=0 // pred_check_branch
    %15 = sbr.rel (0) target = $region5
  $region4: #{tpu_custom_call.1} parent=0 // pred_region
    _
  $region5: #{tpu_custom_call.1} parent=0 // pred_fallthru
    _
  // Predicated region
  $region6: #{tpu_custom_call.1} parent=0 // pred_check
    _
  $region7: #{tpu_custom_call.1} parent=0 // pred_check_branch
    %17 = sbr.rel (0) target = $region9
  $region8: #{tpu_custom_call.1} parent=0 // pred_region
    _
  $region9: #{tpu_custom_call.1} parent=0 // pred_fallthru
    _
  // Predicated region
  $region10: #{tpu_custom_call.1} parent=0 // pred_check
    _
  $region11: #{tpu_custom_call.1} parent=0 // pred_check_branch
    %19 = sbr.rel (0) target = $region13
  $region12: #{tpu_custom_call.1} parent=0 // pred_region
    _
  $region13: #{tpu_custom_call.1} parent=0 // pred_fallthru
    _
  // Predicated region
  $region14: #{tpu_custom_call.1} parent=0 // pred_check
    _
  $region15: #{tpu_custom_call.1} parent=0 // pred_check_branch
    %21 = sbr.rel (0) target = $region17
  $region16: #{tpu_custom_call.1} parent=0 // pred_region
    _
  $region17: #{tpu_custom_call.1} parent=0 // pred_fallthru
    _
  // Predicated region
  $region18: #{tpu_custom_call.1} parent=0 // pred_check
    _
  $region19: #{tpu_custom_call.1} parent=0 // pred_check_branch
    %23 = sbr.rel (0) target = $region21
  $region20: #{tpu_custom_call.1} parent=0 // pred_region
    _
  $region21: #{tpu_custom_call.1} parent=0 // pred_fallthru
    _
  // Predicated region
  $region22: #{tpu_custom_call.1} parent=0 // pred_check
    _
  $region23: #{tpu_custom_call.1} parent=0 // pred_check_branch
    %25 = sbr.rel (0) target = $region25
  $region24: #{tpu_custom_call.1} parent=0 // pred_region
    _
  $region25: #{tpu_custom_call.1} parent=0 // pred_fallthru
    _
  // Predicated region
  $region26: #{tpu_custom_call.1} parent=0 // pred_check
    _
  $region27: #{tpu_custom_call.1} parent=0 // pred_check_branch
    %27 = sbr.rel (0) target = $region29
  $region28: #{tpu_custom_call.1} parent=0 // pred_region
    _
  $region29: #{tpu_custom_call.1} parent=0 // pred_fallthru
    _
  %v28 = vld [vmem:[%s0] sm:$0xff]
  %v29 = vld [vmem:[%s1] sm:$0xff]
  %v30 = vld [vmem:[%s1 + $0x8] sm:$0xff]
  %v31 = vld [vmem:[%s1 + $0x10] sm:$0xff]
  %v32 = vld [vmem:[%s1 + $0x18] sm:$0xff]
  %v33 = vld [vmem:[%s2] sm:$0x1]
  %v35 = vlaneseq
  %v36 = vshrl.u32 %v35, 7
  %v37 = vsub.s32 0, %v36
  %v38 = vrot.slane %v33, %v37
  %vm40 = vcmask 261120
  %v42 = vsel %vm40, %v28, 0
  %44 = vmatprep.subr.mxu0 0.0
  %45 = vmatpush1.msra.mxu0 %v29
  %46 = vmatprep.subr.mxu0 0.0
  %47 = vmatpush1.msra.mxu0 %v30
  %48 = vmatprep.subr.mxu0 0.0
  %49 = vmatpush1.msra.mxu0 %v31
  %50 = vmatprep.subr.mxu0 0.0
  %51 = vmatpush1.msra.mxu0 %v32
  %52 = vmatprep.subr.mxu0 0.0
  %53 = vmatpush1.msra.mxu0 0.0
  %54 = vmatprep.subr.mxu0 0.0
  %55 = vmatpush1.msra.mxu0 0.0
  %56 = vmatprep.subr.mxu0 0.0
  %57 = vmatpush1.msra.mxu0 0.0
  %58 = vmatprep.subr.mxu0 0.0
  %59 = vmatpush1.msra.mxu0 0.0
  %60 = vmatprep.subr.mxu0 0.0
  %61 = vmatpush1.msra.mxu0 0.0
  %62 = vmatprep.subr.mxu0 0.0
  %63 = vmatpush1.msra.mxu0 0.0
  %64 = vmatprep.subr.mxu0 0.0
  %65 = vmatpush1.msra.mxu0 0.0
  %66 = vmatprep.subr.mxu0 0.0
  %67 = vmatpush1.msra.mxu0 0.0
  %68 = vmatprep.subr.mxu0 0.0
  %69 = vmatpush1.msra.mxu0 0.0
  %70 = vmatprep.subr.mxu0 0.0
  %71 = vmatpush1.msra.mxu0 0.0
  %72 = vmatprep.subr.mxu0 0.0
  %73 = vmatpush1.msra.mxu0 0.0
  %74 = vmatprep.subr.mxu0 0.0
  %75 = vmatpush1.msra.mxu0 0.0
  %76 = vmatprep.subr.mxu0 0.0
  %77 = vmatpush1.msra.mxu0 0.0
  %78 = vmatprep.subr.mxu0 0.0
  %79 = vmatpush1.msra.mxu0 0.0
  %80 = vmatprep.subr.mxu0 0.0
  %81 = vmatpush1.msra.mxu0 0.0
  %82 = vmatprep.subr.mxu0 0.0
  %83 = vmatpush1.msra.mxu0 0.0
  %84 = vmatprep.subr.mxu0 0.0
  %85 = vmatpush1.msra.mxu0 0.0
  %86 = vmatprep.subr.mxu0 0.0
  %87 = vmatpush1.msra.mxu0 0.0
  %88 = vmatprep.subr.mxu0 0.0
  %89 = vmatpush1.msra.mxu0 0.0
  %90 = vmatprep.subr.mxu0 0.0
  %91 = vmatpush1.msra.mxu0 0.0
  %92 = vmatprep.subr.mxu0 0.0
  %93 = vmatpush1.msra.mxu0 0.0
  %94 = vmatprep.subr.mxu0 0.0
  %95 = vmatpush1.msra.mxu0 0.0
  %96 = vmatprep.subr.mxu0 0.0
  %97 = vmatpush1.msra.mxu0 0.0
  %98 = vmatprep.subr.mxu0 0.0
  %99 = vmatpush1.msra.mxu0 0.0
  %100 = vmatprep.subr.mxu0 0.0
  %101 = vmatpush1.msra.mxu0 0.0
  %102 = vmatprep.subr.mxu0 0.0
  %103 = vmatpush1.msra.mxu0 0.0
  %104 = vmatprep.subr.mxu0 0.0
  %105 = vmatpush1.msra.mxu0 0.0
  %106 = vmatprep.subr.mxu0 0.0
  %107 = vmatpush1.msra.mxu0 0.0
  %108 = vmatprep.mubr.f32.mxu0 0.0
  %109 = vmatmul.mubr.f32.gmra.mrb[0].mxu0 %v42
  %v110 = vpop.f32.mrb[0].mxu0
  %v111 = vadd.f32 %v38, %v110
  %v112 = vpop.f32.mrb[0].mxu0
  %113 = vdwg.mxu0
  %vm114 = vcmp.ge.f32.partialorder %v111, 0.0
  %v115 = vmul.f32 %v111, 0.03
  %v116 = vsel %vm114, %v111, %v115
  %vm117 = vcmp.ge.f32.partialorder %v116, 0.0
  %v118 = vmul.f32 %v116, 0.03
  %v119 = vsel %vm117, %v116, %v118
  %v120 = vld [vmem:[%s3] sm:$0xff]
  %v121 = vld [vmem:[%s3 + $0x8] sm:$0xff]
  %v122 = vld [vmem:[%s3 + $0x10] sm:$0xff]
  %v123 = vld [vmem:[%s3 + $0x18] sm:$0xff]
  %v124 = vld [vmem:[%s3 + $0x20] sm:$0xff]
  %v125 = vld [vmem:[%s3 + $0x28] sm:$0xff]
  %v126 = vld [vmem:[%s3 + $0x30] sm:$0xff]
  %v127 = vld [vmem:[%s3 + $0x38] sm:$0xff]
  %v128 = vld [vmem:[%s4] sm:$0x1]
  %v130 = vlaneseq
  %v131 = vshrl.u32 %v130, 7
  %v132 = vsub.s32 0, %v131
  %v133 = vrot.slane %v128, %v132
  %vm135 = vcmask 523264
  %v137 = vsel %vm135, %v119, 0
  %139 = vmatprep.subr.mxu0 0.0
  %140 = vmatpush1.msra.mxu0 %v120
  %141 = vmatprep.subr.mxu0 0.0
  %142 = vmatpush1.msra.mxu0 %v121
  %143 = vmatprep.subr.mxu0 0.0
  %144 = vmatpush1.msra.mxu0 %v122
  %145 = vmatprep.subr.mxu0 0.0
  %146 = vmatpush1.msra.mxu0 %v123
  %147 = vmatprep.subr.mxu0 0.0
  %148 = vmatpush1.msra.mxu0 %v124
  %149 = vmatprep.subr.mxu0 0.0
  %150 = vmatpush1.msra.mxu0 %v125
  %151 = vmatprep.subr.mxu0 0.0
  %152 = vmatpush1.msra.mxu0 %v126
  %153 = vmatprep.subr.mxu0 0.0
  %154 = vmatpush1.msra.mxu0 %v127
  %155 = vmatprep.subr.mxu0 0.0
  %156 = vmatpush1.msra.mxu0 0.0
  %157 = vmatprep.subr.mxu0 0.0
  %158 = vmatpush1.msra.mxu0 0.0
  %159 = vmatprep.subr.mxu0 0.0
  %160 = vmatpush1.msra.mxu0 0.0
  %161 = vmatprep.subr.mxu0 0.0
  %162 = vmatpush1.msra.mxu0 0.0
  %163 = vmatprep.subr.mxu0 0.0
  %164 = vmatpush1.msra.mxu0 0.0
  %165 = vmatprep.subr.mxu0 0.0
  %166 = vmatpush1.msra.mxu0 0.0
  %167 = vmatprep.subr.mxu0 0.0
  %168 = vmatpush1.msra.mxu0 0.0
  %169 = vmatprep.subr.mxu0 0.0
  %170 = vmatpush1.msra.mxu0 0.0
  %171 = vmatprep.subr.mxu0 0.0
  %172 = vmatpush1.msra.mxu0 0.0
  %173 = vmatprep.subr.mxu0 0.0
  %174 = vmatpush1.msra.mxu0 0.0
  %175 = vmatprep.subr.mxu0 0.0
  %176 = vmatpush1.msra.mxu0 0.0
  %177 = vmatprep.subr.mxu0 0.0
  %178 = vmatpush1.msra.mxu0 0.0
  %179 = vmatprep.subr.mxu0 0.0
  %180 = vmatpush1.msra.mxu0 0.0
  %181 = vmatprep.subr.mxu0 0.0
  %182 = vmatpush1.msra.mxu0 0.0
  %183 = vmatprep.subr.mxu0 0.0
  %184 = vmatpush1.msra.mxu0 0.0
  %185 = vmatprep.subr.mxu0 0.0
  %186 = vmatpush1.msra.mxu0 0.0
  %187 = vmatprep.subr.mxu0 0.0
  %188 = vmatpush1.msra.mxu0 0.0
  %189 = vmatprep.subr.mxu0 0.0
  %190 = vmatpush1.msra.mxu0 0.0
  %191 = vmatprep.subr.mxu0 0.0
  %192 = vmatpush1.msra.mxu0 0.0
  %193 = vmatprep.subr.mxu0 0.0
  %194 = vmatpush1.msra.mxu0 0.0
  %195 = vmatprep.subr.mxu0 0.0
  %196 = vmatpush1.msra.mxu0 0.0
  %197 = vmatprep.subr.mxu0 0.0
  %198 = vmatpush1.msra.mxu0 0.0
  %199 = vmatprep.subr.mxu0 0.0
  %200 = vmatpush1.msra.mxu0 0.0
  %201 = vmatprep.subr.mxu0 0.0
  %202 = vmatpush1.msra.mxu0 0.0
  %203 = vmatprep.mubr.f32.mxu0 0.0
  %204 = vmatmul.mubr.f32.gmra.mrb[0].mxu0 %v137
  %v205 = vpop.f32.mrb[0].mxu0
  %v206 = vadd.f32 %v133, %v205
  %v207 = vpop.f32.mrb[0].mxu0
  %208 = vdwg.mxu0
  %vm209 = vcmp.ge.f32.partialorder %v206, 0.0
  %v210 = vmul.f32 %v206, 0.03
  %v211 = vsel %vm209, %v206, %v210
  %v212 = vld [vmem:[%s5] sm:$0xff]
  %v213 = vld [vmem:[%s5 + $0x8] sm:$0xff]
  %v214 = vld [vmem:[%s5 + $0x10] sm:$0xff]
  %v215 = vld [vmem:[%s5 + $0x18] sm:$0xff]
  %v216 = vld [vmem:[#allocation2] sm:$0x1]
  %v218 = vlaneseq
  %v219 = vshrl.u32 %v218, 7
  %v220 = vsub.s32 0, %v219
  %v221 = vrot.slane %v216, %v220
  %v224 = vsel %vm40, %v211, 0
  %226 = vmatprep.subr.mxu0 0.0
  %227 = vmatpush1.msra.mxu0 %v212
  %228 = vmatprep.subr.mxu0 0.0
  %229 = vmatpush1.msra.mxu0 %v213
  %230 = vmatprep.subr.mxu0 0.0
  %231 = vmatpush1.msra.mxu0 %v214
  %232 = vmatprep.subr.mxu0 0.0
  %233 = vmatpush1.msra.mxu0 %v215
  %234 = vmatprep.subr.mxu0 0.0
  %235 = vmatpush1.msra.mxu0 0.0
  %236 = vmatprep.subr.mxu0 0.0
  %237 = vmatpush1.msra.mxu0 0.0
  %238 = vmatprep.subr.mxu0 0.0
  %239 = vmatpush1.msra.mxu0 0.0
  %240 = vmatprep.subr.mxu0 0.0
  %241 = vmatpush1.msra.mxu0 0.0
  %242 = vmatprep.subr.mxu0 0.0
  %243 = vmatpush1.msra.mxu0 0.0
  %244 = vmatprep.subr.mxu0 0.0
  %245 = vmatpush1.msra.mxu0 0.0
  %246 = vmatprep.subr.mxu0 0.0
  %247 = vmatpush1.msra.mxu0 0.0
  %248 = vmatprep.subr.mxu0 0.0
  %249 = vmatpush1.msra.mxu0 0.0
  %250 = vmatprep.subr.mxu0 0.0
  %251 = vmatpush1.msra.mxu0 0.0
  %252 = vmatprep.subr.mxu0 0.0
  %253 = vmatpush1.msra.mxu0 0.0
  %254 = vmatprep.subr.mxu0 0.0
  %255 = vmatpush1.msra.mxu0 0.0
  %256 = vmatprep.subr.mxu0 0.0
  %257 = vmatpush1.msra.mxu0 0.0
  %258 = vmatprep.subr.mxu0 0.0
  %259 = vmatpush1.msra.mxu0 0.0
  %260 = vmatprep.subr.mxu0 0.0
  %261 = vmatpush1.msra.mxu0 0.0
  %262 = vmatprep.subr.mxu0 0.0
  %263 = vmatpush1.msra.mxu0 0.0
  %264 = vmatprep.subr.mxu0 0.0
  %265 = vmatpush1.msra.mxu0 0.0
  %266 = vmatprep.subr.mxu0 0.0
  %267 = vmatpush1.msra.mxu0 0.0
  %268 = vmatprep.subr.mxu0 0.0
  %269 = vmatpush1.msra.mxu0 0.0
  %270 = vmatprep.subr.mxu0 0.0
  %271 = vmatpush1.msra.mxu0 0.0
  %272 = vmatprep.subr.mxu0 0.0
  %273 = vmatpush1.msra.mxu0 0.0
  %274 = vmatprep.subr.mxu0 0.0
  %275 = vmatpush1.msra.mxu0 0.0
  %276 = vmatprep.subr.mxu0 0.0
  %277 = vmatpush1.msra.mxu0 0.0
  %278 = vmatprep.subr.mxu0 0.0
  %279 = vmatpush1.msra.mxu0 0.0
  %280 = vmatprep.subr.mxu0 0.0
  %281 = vmatpush1.msra.mxu0 0.0
  %282 = vmatprep.subr.mxu0 0.0
  %283 = vmatpush1.msra.mxu0 0.0
  %284 = vmatprep.subr.mxu0 0.0
  %285 = vmatpush1.msra.mxu0 0.0
  %286 = vmatprep.subr.mxu0 0.0
  %287 = vmatpush1.msra.mxu0 0.0
  %288 = vmatprep.subr.mxu0 0.0
  %289 = vmatpush1.msra.mxu0 0.0
  %290 = vmatprep.mubr.f32.mxu0 0.0
  %291 = vmatmul.mubr.f32.gmra.mrb[0].mxu0 %v224
  %v292 = vpop.f32.mrb[0].mxu0
  %v293 = vadd.f32 %v221, %v292
  %v294 = vpop.f32.mrb[0].mxu0
  %295 = vdwg.mxu0
  %vm296 = vcmp.ge.f32.partialorder %v293, 0.0
  %v297 = vmul.f32 %v293, 0.03
  %v298 = vsel %vm296, %v293, %v297
  %vm299 = vcmask 7168
  %300 = vst.msk [vmem:[%s7] sm:$0xff] %vm299, %v298
  // Predicated region
  $region30: #{tpu_custom_call.1} parent=0 // pred_check
    _
  $region31: #{tpu_custom_call.1} parent=0 // pred_check_branch
    %302 = sbr.rel (0) target = $region33
  $region32: #{tpu_custom_call.1} parent=0 // pred_region
    _
  $region33: #{tpu_custom_call.1} parent=0 // pred_fallthru
    _
  // Predicated region
  $region34: #{tpu_custom_call.1} parent=0 // pred_check
    _
  $region35: #{tpu_custom_call.1} parent=0 // pred_check_branch
    %304 = sbr.rel (0) target = $region37
  $region36: #{tpu_custom_call.1} parent=0 // pred_region
    _
  $region37: #{tpu_custom_call.1} parent=0 // pred_fallthru
    _

</llo_original>
